<compile_context>
chip_gen: v5e
topology: v5e:2x2
jax: 0.10.0
libtpu: 0.0.40
codegen_flags: <defaults>
</compile_context>

<pallas_src>
import functools

import jax
import jax.numpy as jnp
from jax.experimental import pallas as pl
from jax.experimental.pallas import tpu as pltpu

_TARGET_BLOCK_BYTES = 2 * 1024 * 1024    # ~2 MiB per input block
_INPUT_VMEM_BUDGET = 16 * 1024 * 1024    # 2 inputs x 2 buffers x block bytes
_VMEM_LIMIT_BYTES = 32 * 1024 * 1024     # raised scoped VMEM, safe on all gens


def _round_up(x, m):
    return (x + m - 1) // m * m


def _sqerr_partial_kernel(pred_ref, label_ref, out_ref, acc_ref, *,
                          b, f, tb, tf, need_row_mask, need_col_mask):
    """Accumulate (pred - label)^2 into a lane-dense (8, tf) partial slab."""
    i = pl.program_id(0)
    j = pl.program_id(1)

    @pl.when(j == 0)
    def _():
        acc_ref[...] = jnp.zeros_like(acc_ref)

    diff = pred_ref[...].astype(jnp.float32) - label_ref[...].astype(jnp.float32)
    sq = diff * diff

    def accumulate(vals, mask_rows):
        if mask_rows:
            # (tb, 1) sublane predicate; only emitted on the last batch tile.
            row_ok = (i * tb
                      + jax.lax.broadcasted_iota(jnp.int32, (tb, 1), 0)) < b
            vals = jnp.where(row_ok, vals, 0.0)
        # Fold the (tb, tf) tile down to an (8, tf) slab with static 8-row
        # slices (pure VPU adds), then do the small RMW on the accumulator.
        folded = vals[0:8, :]
        for k in range(1, tb // 8):
            folded = folded + vals[k * 8:(k + 1) * 8, :]
        if need_col_mask:
            # (1, tf) lane predicate applied to the folded 8-row slab only
            # (~tb/8x cheaper than masking the full tile); semantically a
            # no-op on interior feature tiles.
            col_ok = (j * tf
                      + jax.lax.broadcasted_iota(jnp.int32, (1, tf), 1)) < f
            folded = jnp.where(col_ok, folded, 0.0)
        acc_ref[...] += folded

    if need_row_mask:
        @pl.when(i == pl.num_programs(0) - 1)
        def _():
            accumulate(sq, True)

        @pl.when(i != pl.num_programs(0) - 1)
        def _():
            accumulate(sq, False)
    else:
        accumulate(sq, False)

    @pl.when(j == pl.num_programs(1) - 1)
    def _():
        out_ref[...] = acc_ref[...]


def align_pred_label_batch_size(pred, label):
    """Exact port of LossFunc.align_pred_label_batch_size (static shapes)."""
    pred_size, label_size = pred.shape[0], label.shape[0]
    if pred_size == label_size:
        return pred, label
    smaller = min(pred_size, label_size)
    return pred[:smaller], label[:smaller]


def _pick_tiles(b, f, itemsize, tile_b, tile_f):
    """Tile selection: (8,128)-aligned, ~2 MiB blocks, VMEM-budgeted."""
    # Sublane multiple for the input dtype (8 f32 / 16 bf16 / 32 int8-fp8).
    sublane = {4: 8, 2: 16, 1: 32}.get(itemsize, 8)
    b_pad = _round_up(b, sublane)
    f_pad = _round_up(f, 128)

    if tile_b is None:
        tb = min(128, b_pad)
        # v7x megacore: make sure the "parallel" batch axis has >= 2 tiles.
        if pl.cdiv(b, tb) == 1 and b > sublane:
            tb = _round_up(pl.cdiv(b, 2), sublane)
    else:
        tb = min(_round_up(tile_b, sublane), b_pad)

    # Cap tf so double-buffered inputs (2 arrays x 2 buffers) fit the budget.
    max_tf = max(128, (_INPUT_VMEM_BUDGET // (4 * tb * itemsize)) // 128 * 128)
    if tile_f is None:
        # Grow the minor axis so each block stays ~2 MiB even when tb is small.
        want_tf = max(4096, _TARGET_BLOCK_BYTES // (tb * itemsize))
        tf = min(f_pad, _round_up(want_tf, 128), max_tf)
    else:
        tf = min(f_pad, _round_up(tile_f, 128), max_tf)
    return tb, tf


def loss_func_forward(pred, label, *, tile_b=None, tile_f=None):
    """Concrete LossFunc forward: align batch dims, then MSE via Pallas."""
    pred, label = align_pred_label_batch_size(pred, label)
    assert pred.shape == label.shape, "pred/label must match after alignment"
    b = pred.shape[0]
    pred2 = pred.reshape(b, -1)
    label2 = label.reshape(b, -1)
    f = pred2.shape[1]

    tb, tf = _pick_tiles(b, f, pred2.dtype.itemsize, tile_b, tile_f)
    n_b = pl.cdiv(b, tb)
    n_f = pl.cdiv(f, tf)
    need_row_mask = (b % tb) != 0
    need_col_mask = (f % tf) != 0

    kernel = functools.partial(
        _sqerr_partial_kernel,
        b=b, f=f, tb=tb, tf=tf,
        need_row_mask=need_row_mask, need_col_mask=need_col_mask,
    )

    in_bytes = (pred2.size * pred2.dtype.itemsize
                + label2.size * label2.dtype.itemsize)
    cost = pl.CostEstimate(
        flops=3 * b * f,
        transcendentals=0,
        bytes_accessed=in_bytes + n_b * 8 * tf * 4,
    )

    partials = pl.pallas_call(
        kernel,
        out_shape=jax.ShapeDtypeStruct((n_b * 8, tf), jnp.float32),
        grid_spec=pltpu.PrefetchScalarGridSpec(
            num_scalar_prefetch=0,
            grid=(n_b, n_f),
            in_specs=[
                pl.BlockSpec((tb, tf), lambda i, j: (i, j)),
                pl.BlockSpec((tb, tf), lambda i, j: (i, j)),
            ],
            out_specs=pl.BlockSpec((8, tf), lambda i, j: (i, 0)),
            scratch_shapes=[pltpu.VMEM((8, tf), jnp.float32)],
        ),
        compiler_params=pltpu.CompilerParams(
            dimension_semantics=("parallel", "arbitrary"),
            vmem_limit_bytes=_VMEM_LIMIT_BYTES,
        ),
        cost_estimate=cost,
    )(pred2, label2)

    # Tiny final reduction + mean (torch mse_loss default reduction). Divisor
    # is formed in double precision then cast (b*f may exceed f32 int range).
    denom = jnp.float32(float(b) * float(f))
    return (jnp.sum(partials) / denom).astype(jnp.float32)


if __name__ == "__main__":
    key = jax.random.PRNGKey(0)
    k1, k2, k3, k4, k5, k6, k7, k8 = jax.random.split(key, 8)

    # 1) Mismatched batch sizes exercise align_pred_label_batch_size; the
    #    aligned batch (10) is not a multiple of 8 so the gated row-mask path
    #    runs, and the auto batch-split gives a 2-tile parallel axis.
    pred = jax.random.normal(k1, (12, 640), dtype=jnp.float32)
    label = jax.random.normal(k2, (10, 640), dtype=jnp.float32)
    loss = loss_func_forward(pred, label)
    jax.block_until_ready(loss)
    p_a, l_a = align_pred_label_batch_size(pred, label)
    ref = jnp.mean((p_a - l_a) ** 2)
    assert jnp.allclose(loss, ref, rtol=1e-4, atol=1e-6), (loss, ref)

    # 2) Multi-batch-tile shape: grid (3, 1) with tb=128; ragged rows on the
    #    last batch tile only (interior tiles take the unmasked fast path).
    pred2 = jax.random.normal(k3, (272, 2560), dtype=jnp.float32)
    label2 = jax.random.normal(k4, (272, 2560), dtype=jnp.float32)
    loss2 = loss_func_forward(pred2, label2)
    jax.block_until_ready(loss2)
    ref2 = jnp.mean((pred2 - label2) ** 2)
    assert jnp.allclose(loss2, ref2, rtol=1e-4, atol=1e-6), (loss2, ref2)

    # 3) Explicit small tiles: grid (3, 3), ragged on both axes — exercises
    #    multi-feature-step accumulation plus row- and column-mask paths.
    pred3 = jax.random.normal(k5, (20, 700), dtype=jnp.float32)
    label3 = jax.random.normal(k6, (20, 700), dtype=jnp.float32)
    loss3 = loss_func_forward(pred3, label3, tile_b=8, tile_f=256)
    jax.block_until_ready(loss3)
    ref3 = jnp.mean((pred3 - label3) ** 2)
    assert jnp.allclose(loss3, ref3, rtol=1e-4, atol=1e-6), (loss3, ref3)

    # 4) bf16 inputs (f32 accumulation in-kernel) with a >2-D label layout.
    pred4 = jax.random.normal(k7, (16, 4, 128), dtype=jnp.bfloat16)
    label4 = jax.random.normal(k8, (16, 4, 128), dtype=jnp.bfloat16)
    loss4 = loss_func_forward(pred4, label4)
    jax.block_until_ready(loss4)
    ref4 = jnp.mean((pred4.astype(jnp.float32)
                     - label4.astype(jnp.float32)) ** 2)
    assert jnp.allclose(loss4, ref4, rtol=1e-4, atol=1e-6), (loss4, ref4)

    print("KERNEL_OK")
</pallas_src>

<mosaic_0001>
module attributes {stable_mosaic.version = 11 : i64} {
  func.func @_sqerr_partial_kernel(%arg0: i32, %arg1: i32, %arg2: memref<8x640xf32, #tpu.memory_space<vmem>>, %arg3: memref<8x640xf32, #tpu.memory_space<vmem>>, %arg4: memref<8x640xf32, #tpu.memory_space<vmem>>, %arg5: memref<8x640xf32, #tpu.memory_space<vmem>>) attributes {dimension_semantics = [#tpu.dimension_semantics<parallel>, #tpu.dimension_semantics<arbitrary>], iteration_bounds = array<i64: 2, 1>, scalar_prefetch = 0 : i64, scratch_operands = 1 : i64, tpu.core_type = #tpu.core_type<tc>, window_params = [{transform_indices = @transform_0, window_bounds = array<i64: 8, 640>}, {transform_indices = @transform_1, window_bounds = array<i64: 8, 640>}, {transform_indices = @transform_2, window_bounds = array<i64: 8, 640>}]} {
    %c0_i32 = arith.constant 0 : i32
    %0 = arith.cmpi eq, %arg1, %c0_i32 : i32
    %1 = arith.extui %0 : i1 to i32
    %c0_i32_0 = arith.constant 0 : i32
    %2 = arith.cmpi ne, %1, %c0_i32_0 : i32
    scf.if %2 {
      %cst = arith.constant 0.000000e+00 : f32
      %16 = vector.broadcast %cst : f32 to vector<8x640xf32>
      %c0_9 = arith.constant 0 : index
      %c0_10 = arith.constant 0 : index
      %17 = vector.load %arg5[%c0_9, %c0_10] : memref<8x640xf32, #tpu.memory_space<vmem>>, vector<8x640xf32>
      tpu.vector_store %arg5[%c0_9, %c0_10], %16 {strides = array<i32>} : memref<8x640xf32, #tpu.memory_space<vmem>>, vector<8x640xf32>,
    } else {
    }
    %c0 = arith.constant 0 : index
    %c0_1 = arith.constant 0 : index
    %3 = vector.load %arg2[%c0, %c0_1] : memref<8x640xf32, #tpu.memory_space<vmem>>, vector<8x640xf32>
    %c0_2 = arith.constant 0 : index
    %c0_3 = arith.constant 0 : index
    %4 = vector.load %arg3[%c0_2, %c0_3] : memref<8x640xf32, #tpu.memory_space<vmem>>, vector<8x640xf32>
    %5 = arith.subf %3, %4 : vector<8x640xf32>
    %6 = arith.mulf %5, %5 : vector<8x640xf32>
    %c1_i32 = arith.constant 1 : i32
    %7 = arith.cmpi eq, %arg0, %c1_i32 : i32
    %8 = arith.extui %7 : i1 to i32
    %c0_i32_4 = arith.constant 0 : i32
    %9 = arith.cmpi ne, %8, %c0_i32_4 : i32
    scf.if %9 {
      %c8_i32 = arith.constant 8 : i32
      %16 = arith.muli %arg0, %c8_i32 : i32
      %17 = tpu.iota {dimensions = array<i32: 0>} : vector<8x1xi32>
      %18 = vector.broadcast %16 : i32 to vector<8x1xi32>
      %19 = arith.addi %18, %17 : vector<8x1xi32>
      %c10_i32 = arith.constant 10 : i32
      %20 = vector.broadcast %c10_i32 : i32 to vector<8x1xi32>
      %21 = arith.cmpi slt, %19, %20 : vector<8x1xi32>
      %cst = arith.constant 0.000000e+00 : f32
      %22 = vector.shape_cast %21 : vector<8x1xi1> to vector<8x1xi1>
      %23 = vector.broadcast %22 : vector<8x1xi1> to vector<8x640xi1>
      %24 = vector.broadcast %cst : f32 to vector<8x640xf32>
      %25 = arith.select %23, %6, %24 : vector<8x640xi1>, vector<8x640xf32>
      %c0_9 = arith.constant 0 : index
      %c0_10 = arith.constant 0 : index
      %26 = vector.load %arg5[%c0_9, %c0_10] : memref<8x640xf32, #tpu.memory_space<vmem>>, vector<8x640xf32>
      %27 = arith.addf %26, %25 : vector<8x640xf32>
      %c0_11 = arith.constant 0 : index
      %c0_12 = arith.constant 0 : index
      %28 = vector.load %arg5[%c0_11, %c0_12] : memref<8x640xf32, #tpu.memory_space<vmem>>, vector<8x640xf32>
      tpu.vector_store %arg5[%c0_11, %c0_12], %27 {strides = array<i32>} : memref<8x640xf32, #tpu.memory_space<vmem>>, vector<8x640xf32>,
    } else {
    }
    %c1_i32_5 = arith.constant 1 : i32
    %10 = arith.cmpi ne, %arg0, %c1_i32_5 : i32
    %11 = arith.extui %10 : i1 to i32
    %c0_i32_6 = arith.constant 0 : i32
    %12 = arith.cmpi ne, %11, %c0_i32_6 : i32
    scf.if %12 {
      %c0_9 = arith.constant 0 : index
      %c0_10 = arith.constant 0 : index
      %16 = vector.load %arg5[%c0_9, %c0_10] : memref<8x640xf32, #tpu.memory_space<vmem>>, vector<8x640xf32>
      %17 = arith.addf %16, %6 : vector<8x640xf32>
      %c0_11 = arith.constant 0 : index
      %c0_12 = arith.constant 0 : index
      %18 = vector.load %arg5[%c0_11, %c0_12] : memref<8x640xf32, #tpu.memory_space<vmem>>, vector<8x640xf32>
      tpu.vector_store %arg5[%c0_11, %c0_12], %17 {strides = array<i32>} : memref<8x640xf32, #tpu.memory_space<vmem>>, vector<8x640xf32>,
    } else {
    }
    %c0_i32_7 = arith.constant 0 : i32
    %13 = arith.cmpi eq, %arg1, %c0_i32_7 : i32
    %14 = arith.extui %13 : i1 to i32
    %c0_i32_8 = arith.constant 0 : i32
    %15 = arith.cmpi ne, %14, %c0_i32_8 : i32
    scf.if %15 {
      %c0_9 = arith.constant 0 : index
      %c0_10 = arith.constant 0 : index
      %16 = vector.load %arg5[%c0_9, %c0_10] : memref<8x640xf32, #tpu.memory_space<vmem>>, vector<8x640xf32>
      %c0_11 = arith.constant 0 : index
      %c0_12 = arith.constant 0 : index
      %17 = vector.load %arg4[%c0_11, %c0_12] : memref<8x640xf32, #tpu.memory_space<vmem>>, vector<8x640xf32>
      tpu.vector_store %arg4[%c0_11, %c0_12], %16 {strides = array<i32>} : memref<8x640xf32, #tpu.memory_space<vmem>>, vector<8x640xf32>,
    } else {
    }
    return
  }
  func.func @transform_0(%arg0: i32, %arg1: i32) -> (i32, i32) {
    %c0_i32 = arith.constant 0 : i32
    return %arg0, %arg1 : i32, i32
  }
  func.func @transform_1(%arg0: i32, %arg1: i32) -> (i32, i32) {
    %c0_i32 = arith.constant 0 : i32
    return %arg0, %arg1 : i32, i32
  }
  func.func @transform_2(%arg0: i32, %arg1: i32) -> (i32, i32) {
    %c0_i32 = arith.constant 0 : i32
    %c0_i32_0 = arith.constant 0 : i32
    return %arg0, %c0_i32 : i32, i32
  }
}

</mosaic_0001>

<llo_original>
// kernel: tpu_custom_call.1
$region0: #{tpu_custom_call.1}
  #allocation0 [shape = 'u32[]', space=smem, size = 0x4, offset = 0x4, fixed_abs, tag = 'smem constant byte address 0x4 - core index']
  #allocation1 [shape = 'u32[72,128]{1,0:T(1,128)}', space=vmem, size = 0x9000, scoped, tag = 'internal scratch']
  #allocation2 [shape = 'f32[8,640]{1,0:T(8,128)}', space=vmem, size = 0x5000, scoped, tag = 'scratch operand']
  %s0 = inlined_call_operand.hbm [shape: f32[10,640], index: 0, kind: input, shape index: {}]
  %s1 = inlined_call_operand.hbm [shape: f32[10,640], index: 1, kind: input, shape index: {}]
  %s2 = inlined_call_operand.hbm [shape: f32[16,640], index: 2, kind: output, shape index: {}]
  %s3 = sld [smem:[#allocation0]]
  $region65: #{tpu_custom_call.1} parent=0
    _
  %s5 = ssub.s32 1, %s3
  %s6 = scalar_select 0, %s5, %s3
  $region1: #{tpu_custom_call.1} parent=0
    #allocation3 [shape = 'u8[40960]{0}', space=vmem, size = 0xa000, scoped, tag = 'input window, operand 0']
    #allocation4 [shape = 's32[2]{0}', space=sflag, size = 0x8, scoped, tag = 'scoped memory for tpu_custom_call.1']
    #allocation5 [shape = 's32[2]{0}', space=sflag, size = 0x8, scoped, tag = 'scoped memory for tpu_custom_call.1']
    #allocation6 [shape = 'u8[40960]{0}', space=vmem, size = 0xa000, scoped, tag = 'input window, operand 1']
    #allocation7 [shape = 's32[2]{0}', space=sflag, size = 0x8, scoped, tag = 'scoped memory for tpu_custom_call.1']
    #allocation8 [shape = 'u8[40960]{0}', space=vmem, size = 0xa000, scoped, tag = 'output window, operand 0']
    %7 = vsyncpa [#allocation4], 0
    %s8 = scalar_lea.sflag [#allocation4], 1
    %9 = vsyncpa %s8, 0
    %10 = vsyncpa [#allocation7], 0
    %s11 = scalar_lea.sflag [#allocation7], 1
    %12 = vsyncpa %s11, 0
    %13 = vsyncpa [#allocation5], 0
    %s14 = scalar_lea.sflag [#allocation5], 1
    %15 = vsyncpa %s14, 0
    loop: start=0, step=1, limit=4
    $region2: #{tpu_custom_call.1} parent=1 // loop_pre_header
      _
    $region3: #{tpu_custom_call.1} parent=1 // loop_header
      %s17 = sphi 0, %s21
      %p18 = scmp.ge.s32.totalorder %s17, 4
      %s24 = sphi 0, %s36
      %s25 = sphi 0, %s32
      %s26 = sphi 0, %s24
      %s27 = sphi 0, %s25
      %s28 = sphi 0, %s26
      %s29 = sphi 0, %s27
      %s41 = sphi 0, %s43
      %s44 = sphi 0, %s41
      %s45 = sphi 0, %s44
      %s61 = sphi 0, %s45
      %s69 = sphi 0, %s71
      %s72 = sphi 0, %s69
      %s73 = sphi 0, %s72
      %s89 = sphi 0, %s73
      %s95 = sphi 0, %s97
      %s98 = sphi 0, %s95
      %s99 = sphi 0, %s98
      %s115 = sphi 0, %s99
    $region4: #{tpu_custom_call.1} parent=1 // loop_header_branch
      %20 = sbr.rel (%p18) target = $region8
    $region5: #{tpu_custom_call.1} parent=1 // loop_body
      %s22 = ssub.s32 %s17, 1
      %s23 = ssub.s32 %s17, 2
      %s30 = sadd.s32 1, %s25
      %p31 = scmp.ge.s32.totalorder %s30, 1
      %s32 = scalar_select %p31, 0, %s30
      %s33 = sadd.s32 1, %s24
      %s34 = scalar_select %p31, %s33, %s24
      %p35 = scmp.ge.s32.totalorder %s34, 2
      %s36 = scalar_select %p35, 0, %s34
      %s37 = ssub.s32 %s24, %s36
      %s38 = ssub.s32 %s25, %s32
      %s39 = sor.u32 %s37, %s38
      %p40 = scmp.eq.s32.totalorder %s39, 0
      %s42 = sadd.s32 %s41, 1
      %s43 = scalar_select %p40, %s41, %s42
      %p46 = pneg %p40
      %p47 = scmp.eq.s32.totalorder %s17, 1
      %p48 = por %p46, %p47
      %p49 = scmp.ne.s32.totalorder %s41, %s44
      %p50 = scmp.eq.s32.totalorder %s17, 0
      %p51 = por %p49, %p50
      %p52 = scmp.ne.s32.totalorder %s41, %s44
      %p53 = scmp.eq.s32.totalorder %s22, 1
      %p54 = por %p52, %p53
      %p55 = scmp.ne.s32.totalorder %s44, %s45
      %p56 = scmp.eq.s32.totalorder %s22, 0
      %p57 = por %p55, %p56
      %p58 = scmp.ne.s32.totalorder %s44, %s45
      %p59 = scmp.eq.s32.totalorder %s23, 1
      %p60 = por %p58, %p59
      %p62 = scmp.ne.s32.totalorder %s45, %s61
      %p63 = scmp.eq.s32.totalorder %s23, 0
      %p64 = por %p62, %p63
      %s65 = ssub.s32 %s24, %s36
      %s66 = ssub.s32 %s25, %s32
      %s67 = sor.u32 %s65, %s66
      %p68 = scmp.eq.s32.totalorder %s67, 0
      %s70 = sadd.s32 %s69, 1
      %s71 = scalar_select %p68, %s69, %s70
      %p74 = pneg %p68
      %p75 = scmp.eq.s32.totalorder %s17, 1
      %p76 = por %p74, %p75
      %p77 = scmp.ne.s32.totalorder %s69, %s72
      %p78 = scmp.eq.s32.totalorder %s17, 0
      %p79 = por %p77, %p78
      %p80 = scmp.ne.s32.totalorder %s69, %s72
      %p81 = scmp.eq.s32.totalorder %s22, 1
      %p82 = por %p80, %p81
      %p83 = scmp.ne.s32.totalorder %s72, %s73
      %p84 = scmp.eq.s32.totalorder %s22, 0
      %p85 = por %p83, %p84
      %p86 = scmp.ne.s32.totalorder %s72, %s73
      %p87 = scmp.eq.s32.totalorder %s23, 1
      %p88 = por %p86, %p87
      %p90 = scmp.ne.s32.totalorder %s73, %s89
      %p91 = scmp.eq.s32.totalorder %s23, 0
      %p92 = por %p90, %p91
      %s93 = ssub.s32 %s24, %s36
      %p94 = scmp.eq.s32.totalorder %s93, 0
      %s96 = sadd.s32 %s95, 1
      %s97 = scalar_select %p94, %s95, %s96
      %p100 = pneg %p94
      %p101 = scmp.eq.s32.totalorder %s17, 1
      %p102 = por %p100, %p101
      %p103 = scmp.ne.s32.totalorder %s95, %s98
      %p104 = scmp.eq.s32.totalorder %s17, 0
      %p105 = por %p103, %p104
      %p106 = scmp.ne.s32.totalorder %s95, %s98
      %p107 = scmp.eq.s32.totalorder %s22, 1
      %p108 = por %p106, %p107
      %p109 = scmp.ne.s32.totalorder %s98, %s99
      %p110 = scmp.eq.s32.totalorder %s22, 0
      %p111 = por %p109, %p110
      %p112 = scmp.ne.s32.totalorder %s98, %s99
      %p113 = scmp.eq.s32.totalorder %s23, 1
      %p114 = por %p112, %p113
      %p116 = scmp.ne.s32.totalorder %s99, %s115
      %p117 = scmp.eq.s32.totalorder %s23, 0
      %p118 = por %p116, %p117
      %p119 = scmp.le.s32.totalorder 1, %s17
      %p120 = scmp.lt.s32.totalorder %s17, 3
      %p121 = pnand %p119, %p120
      %p122 = pneg %p121
      // Predicated region
      $region9: #{tpu_custom_call.1} parent=5 // pred_check
        _
      $region10: #{tpu_custom_call.1} parent=5 // pred_check_branch
        %124 = sbr.rel (%p121) target = $region12
      $region11: #{tpu_custom_call.1} parent=5 // pred_region
        %s125 = ssub.s32 %s17, 1
      $region12: #{tpu_custom_call.1} parent=5 // pred_fallthru
        _
      %p126 = scmp.lt.s32.totalorder %s17, 2
      // Predicated region
      $region13: #{tpu_custom_call.1} parent=5 // pred_check
        %p127 = pneg %p126
      $region14: #{tpu_custom_call.1} parent=5 // pred_check_branch
        %129 = sbr.rel (%p127) target = $region16
      $region15: #{tpu_custom_call.1} parent=5 // pred_region
        // Predicated region
        $region17: #{tpu_custom_call.1} parent=15 // pred_check
          %p130 = pneg %p51
        $region18: #{tpu_custom_call.1} parent=15 // pred_check_branch
          %132 = sbr.rel (%p130) target = $region20
        $region19: #{tpu_custom_call.1} parent=15 // pred_region
          %s133 = sand.u32 %s41, 1
          %s134 = scalar_lea.sflag [#allocation4], %s133
          %s135 = sand.u32 %s41, 1
          %s136 = smul.addr %s135, 40
          %s137 = scalar_lea.vmem [#allocation3], %s136
          %s138 = smul.u32 5, %s25
          %140 = vsyncadd %s134, 0
          %s141 = smul.addr %s24, 5
          %s142 = sadd.s32 %s138, %s141
          %s143 = smul.addr %s142, 8
          %s144 = scalar_lea.hbm %s0, %s143
          %s146 = sshll.u32 %s144, 4
          %s147 = int_to_ptr.hbm [resolvable:$true] %s146
          %s148 = sshll.u32 %s137, 4
          %s149 = int_to_ptr.vmem [resolvable:$true] %s148
          %151 = dma.hbm_to_vmem [thread:$0]  %s147, 640, %s149, %s134
        $region20: #{tpu_custom_call.1} parent=15 // pred_fallthru
          _
        // Predicated region
        $region21: #{tpu_custom_call.1} parent=15 // pred_check
          %p152 = pneg %p79
        $region22: #{tpu_custom_call.1} parent=15 // pred_check_branch
          %154 = sbr.rel (%p152) target = $region24
        $region23: #{tpu_custom_call.1} parent=15 // pred_region
          %s155 = sand.u32 %s69, 1
          %s156 = scalar_lea.sflag [#allocation7], %s155
          %s157 = sand.u32 %s69, 1
          %s158 = smul.addr %s157, 40
          %s159 = scalar_lea.vmem [#allocation6], %s158
          %s160 = smul.u32 5, %s25
          %162 = vsyncadd %s156, 0
          %s163 = smul.addr %s24, 5
          %s164 = sadd.s32 %s160, %s163
          %s165 = smul.addr %s164, 8
          %s166 = scalar_lea.hbm %s1, %s165
          %s168 = sshll.u32 %s166, 4
          %s169 = int_to_ptr.hbm [resolvable:$true] %s168
          %s170 = sshll.u32 %s159, 4
          %s171 = int_to_ptr.vmem [resolvable:$true] %s170
          %173 = dma.hbm_to_vmem [thread:$0]  %s169, 640, %s171, %s156
        $region24: #{tpu_custom_call.1} parent=15 // pred_fallthru
          _
      $region16: #{tpu_custom_call.1} parent=5 // pred_fallthru
        _
      %p174 = scmp.le.s32.totalorder 1, %s17
      %p175 = scmp.lt.s32.totalorder %s17, 3
      %p176 = pnand %p174, %p175
      %p177 = pneg %p176
      // Predicated region
      $region25: #{tpu_custom_call.1} parent=5 // pred_check
        _
      $region26: #{tpu_custom_call.1} parent=5 // pred_check_branch
        %179 = sbr.rel (%p176) target = $region28
      $region27: #{tpu_custom_call.1} parent=5 // pred_region
        %s180 = ssub.s32 %s17, 1
        %s181 = sand.u32 %s44, 1
        %s182 = scalar_lea.sflag [#allocation4], %s181
        %s183 = sand.u32 %s44, 1
        %s184 = smul.addr %s183, 40
        %s185 = scalar_lea.vmem [#allocation3], %s184
        // Predicated region
        $region29: #{tpu_custom_call.1} parent=27 // pred_check
          %p186 = pneg %p57
        $region30: #{tpu_custom_call.1} parent=27 // pred_check_branch
          %188 = sbr.rel (%p186) target = $region32
        $region31: #{tpu_custom_call.1} parent=27 // pred_region
          %190 = dma.done %s182, 640
        $region32: #{tpu_custom_call.1} parent=27 // pred_fallthru
          _
        %s191 = sand.u32 %s72, 1
        %s192 = scalar_lea.sflag [#allocation7], %s191
        %s193 = sand.u32 %s72, 1
        %s194 = smul.addr %s193, 40
        %s195 = scalar_lea.vmem [#allocation6], %s194
        // Predicated region
        $region33: #{tpu_custom_call.1} parent=27 // pred_check
          %p196 = pneg %p85
        $region34: #{tpu_custom_call.1} parent=27 // pred_check_branch
          %198 = sbr.rel (%p196) target = $region36
        $region35: #{tpu_custom_call.1} parent=27 // pred_region
          %200 = dma.done %s192, 640
        $region36: #{tpu_custom_call.1} parent=27 // pred_fallthru
          _
        %s201 = sand.u32 %s44, 1
        %s202 = scalar_lea.sflag [#allocation4], %s201
        %s203 = sand.u32 %s44, 1
        %s204 = smul.addr %s203, 40
        %s205 = scalar_lea.vmem [#allocation3], %s204
        %p206 = pneg %p57
        %p207 = pneg %p54
        %s208 = sand.u32 %s72, 1
        %s209 = scalar_lea.sflag [#allocation7], %s208
        %s210 = sand.u32 %s72, 1
        %s211 = smul.addr %s210, 40
        %s212 = scalar_lea.vmem [#allocation6], %s211
        %p213 = pneg %p85
        %p214 = pneg %p82
        %p215 = pneg %p111
        %p216 = pneg %p108
        %s217 = sand.u32 %s98, 1
        %s218 = scalar_lea.sflag [#allocation5], %s217
        %s219 = sand.u32 %s98, 1
        %s220 = smul.addr %s219, 40
        %s221 = scalar_lea.vmem [#allocation8], %s220
        %s222 = smul.u32 5, %s27
        %s223 = smul.u32 5, %s27
        %p224 = scmp.eq.s32.totalorder %s27, 0
        // Predicated region
        $region37: #{tpu_custom_call.1} parent=27 // pred_check
          %p225 = pneg %p224
        $region38: #{tpu_custom_call.1} parent=27 // pred_check_branch
          %227 = sbr.rel (%p225) target = $region40
        $region39: #{tpu_custom_call.1} parent=27 // pred_region
          %228 = vst [vmem:[#allocation2] sm:$0xff] 0.0
          %229 = vst [vmem:[#allocation2 + $0x8] sm:$0xff] 0.0
          %230 = vst [vmem:[#allocation2 + $0x10] sm:$0xff] 0.0
          %231 = vst [vmem:[#allocation2 + $0x18] sm:$0xff] 0.0
          %232 = vst [vmem:[#allocation2 + $0x20] sm:$0xff] 0.0
        $region40: #{tpu_custom_call.1} parent=27 // pred_fallthru
          _
        %v233 = vld [vmem:[%s185] sm:$0xff]
        %v234 = vld [vmem:[%s185 + $0x8] sm:$0xff]
        %v235 = vld [vmem:[%s185 + $0x10] sm:$0xff]
        %v236 = vld [vmem:[%s185 + $0x18] sm:$0xff]
        %v237 = vld [vmem:[%s185 + $0x20] sm:$0xff]
        %v238 = vld [vmem:[%s195] sm:$0xff]
        %v239 = vld [vmem:[%s195 + $0x8] sm:$0xff]
        %v240 = vld [vmem:[%s195 + $0x10] sm:$0xff]
        %v241 = vld [vmem:[%s195 + $0x18] sm:$0xff]
        %v242 = vld [vmem:[%s195 + $0x20] sm:$0xff]
        %v243 = vsub.f32 %v233, %v238
        %v244 = vsub.f32 %v234, %v239
        %v245 = vsub.f32 %v235, %v240
        %v246 = vsub.f32 %v236, %v241
        %v247 = vsub.f32 %v237, %v242
        %v248 = vmul.f32 %v243, %v243
        %v249 = vmul.f32 %v244, %v244
        %v250 = vmul.f32 %v245, %v245
        %v251 = vmul.f32 %v246, %v246
        %v252 = vmul.f32 %v247, %v247
        %p253 = scmp.eq.s32.totalorder %s26, 1
        // Predicated region
        $region41: #{tpu_custom_call.1} parent=27 // pred_check
          %p254 = pneg %p253
        $region42: #{tpu_custom_call.1} parent=27 // pred_check_branch
          %256 = sbr.rel (%p254) target = $region44
        $region43: #{tpu_custom_call.1} parent=27 // pred_region
          %s257 = smul.u32 %s26, 8
          %v258 = vlaneseq
          %v259 = vshrl.u32 %v258, 7
          %v260 = vstv %s257
          %v261 = vadd.s32 %v260, %v259
          %vm262 = vcmp.lt.s32.totalorder %v261, 10
          %v263 = vsel %vm262, 1, 0
          %vm264 = vcmp.eq.s32.totalorder %v263, 1
          %v265 = vsel %vm264, %v248, 0.0
          %v266 = vsel %vm264, %v249, 0.0
          %v267 = vsel %vm264, %v250, 0.0
          %v268 = vsel %vm264, %v251, 0.0
          %v269 = vsel %vm264, %v252, 0.0
          %v270 = vld [vmem:[#allocation2] sm:$0xff]
          %v271 = vld [vmem:[#allocation2 + $0x8] sm:$0xff]
          %v272 = vld [vmem:[#allocation2 + $0x10] sm:$0xff]
          %v273 = vld [vmem:[#allocation2 + $0x18] sm:$0xff]
          %v274 = vld [vmem:[#allocation2 + $0x20] sm:$0xff]
          %v275 = vadd.f32 %v270, %v265
          %v276 = vadd.f32 %v271, %v266
          %v277 = vadd.f32 %v272, %v267
          %v278 = vadd.f32 %v273, %v268
          %v279 = vadd.f32 %v274, %v269
          %280 = vst [vmem:[#allocation2] sm:$0xff] %v275
          %281 = vst [vmem:[#allocation2 + $0x8] sm:$0xff] %v276
          %282 = vst [vmem:[#allocation2 + $0x10] sm:$0xff] %v277
          %283 = vst [vmem:[#allocation2 + $0x18] sm:$0xff] %v278
          %284 = vst [vmem:[#allocation2 + $0x20] sm:$0xff] %v279
        $region44: #{tpu_custom_call.1} parent=27 // pred_fallthru
          _
        %p285 = scmp.ne.s32.totalorder %s26, 1
        // Predicated region
        $region45: #{tpu_custom_call.1} parent=27 // pred_check
          %p286 = pneg %p285
        $region46: #{tpu_custom_call.1} parent=27 // pred_check_branch
          %288 = sbr.rel (%p286) target = $region48
        $region47: #{tpu_custom_call.1} parent=27 // pred_region
          %v289 = vld [vmem:[#allocation2] sm:$0xff]
          %v290 = vld [vmem:[#allocation2 + $0x8] sm:$0xff]
          %v291 = vld [vmem:[#allocation2 + $0x10] sm:$0xff]
          %v292 = vld [vmem:[#allocation2 + $0x18] sm:$0xff]
          %v293 = vld [vmem:[#allocation2 + $0x20] sm:$0xff]
          %v294 = vadd.f32 %v289, %v248
          %v295 = vadd.f32 %v290, %v249
          %v296 = vadd.f32 %v291, %v250
          %v297 = vadd.f32 %v292, %v251
          %v298 = vadd.f32 %v293, %v252
          %299 = vst [vmem:[#allocation2] sm:$0xff] %v294
          %300 = vst [vmem:[#allocation2 + $0x8] sm:$0xff] %v295
          %301 = vst [vmem:[#allocation2 + $0x10] sm:$0xff] %v296
          %302 = vst [vmem:[#allocation2 + $0x18] sm:$0xff] %v297
          %303 = vst [vmem:[#allocation2 + $0x20] sm:$0xff] %v298
        $region48: #{tpu_custom_call.1} parent=27 // pred_fallthru
          _
        // Predicated region
        $region49: #{tpu_custom_call.1} parent=27 // pred_check
          %p304 = pneg %p224
        $region50: #{tpu_custom_call.1} parent=27 // pred_check_branch
          %306 = sbr.rel (%p304) target = $region52
        $region51: #{tpu_custom_call.1} parent=27 // pred_region
          %v307 = vld [vmem:[#allocation2] sm:$0xff]
          %v308 = vld [vmem:[#allocation2 + $0x8] sm:$0xff]
          %v309 = vld [vmem:[#allocation2 + $0x10] sm:$0xff]
          %v310 = vld [vmem:[#allocation2 + $0x18] sm:$0xff]
          %v311 = vld [vmem:[#allocation2 + $0x20] sm:$0xff]
          %312 = vst [vmem:[%s221] sm:$0xff] %v307
          %313 = vst [vmem:[%s221 + $0x8] sm:$0xff] %v308
          %314 = vst [vmem:[%s221 + $0x10] sm:$0xff] %v309
          %315 = vst [vmem:[%s221 + $0x18] sm:$0xff] %v310
          %316 = vst [vmem:[%s221 + $0x20] sm:$0xff] %v311
        $region52: #{tpu_custom_call.1} parent=27 // pred_fallthru
          _
        %s317 = sand.u32 %s98, 1
        %s318 = scalar_lea.sflag [#allocation5], %s317
        %s319 = sand.u32 %s98, 1
        %s320 = smul.addr %s319, 40
        %s321 = scalar_lea.vmem [#allocation8], %s320
        // Predicated region
        $region53: #{tpu_custom_call.1} parent=27 // pred_check
          %p322 = pneg %p108
        $region54: #{tpu_custom_call.1} parent=27 // pred_check_branch
          %324 = sbr.rel (%p322) target = $region56
        $region55: #{tpu_custom_call.1} parent=27 // pred_region
          %326 = vsyncadd %s318, 0
          %s327 = smul.addr %s26, 5
          %s328 = smul.addr %s327, 8
          %s329 = scalar_lea.hbm %s2, %s328
          %s331 = sshll.u32 %s321, 4
          %s332 = int_to_ptr.vmem [resolvable:$true] %s331
          %s333 = sshll.u32 %s329, 4
          %s334 = int_to_ptr.hbm [resolvable:$true] %s333
          %336 = dma.vmem_to_hbm [thread:$0]  %s332, 640, %s334, %s318
        $region56: #{tpu_custom_call.1} parent=27 // pred_fallthru
          _
      $region28: #{tpu_custom_call.1} parent=5 // pred_fallthru
        _
      %p337 = scmp.le.s32.totalorder 2, %s17
      // Predicated region
      $region57: #{tpu_custom_call.1} parent=5 // pred_check
        %p338 = pneg %p337
      $region58: #{tpu_custom_call.1} parent=5 // pred_check_branch
        %340 = sbr.rel (%p338) target = $region60
      $region59: #{tpu_custom_call.1} parent=5 // pred_region
        %s341 = ssub.s32 %s17, 2
        // Predicated region
        $region61: #{tpu_custom_call.1} parent=59 // pred_check
          %p342 = pneg %p114
        $region62: #{tpu_custom_call.1} parent=59 // pred_check_branch
          %344 = sbr.rel (%p342) target = $region64
        $region63: #{tpu_custom_call.1} parent=59 // pred_region
          %s345 = sand.u32 %s99, 1
          %s346 = scalar_lea.sflag [#allocation5], %s345
          %s347 = sand.u32 %s99, 1
          %s348 = smul.addr %s347, 40
          %s349 = scalar_lea.vmem [#allocation8], %s348
          %351 = dma.done %s346, 640
        $region64: #{tpu_custom_call.1} parent=59 // pred_fallthru
          _
      $region60: #{tpu_custom_call.1} parent=5 // pred_fallthru
        _
    $region6: #{tpu_custom_call.1} parent=1 // loop_footer
      %s21 = sadd.s32 1, %s17
    $region7: #{tpu_custom_call.1} parent=1 // loop_footer_branch
      %16 = sbr.rel target = $region3
    $region8: #{tpu_custom_call.1} parent=1 // loop_exit
      _
    %352 = vsyncpa [#allocation4], 1
    %s353 = scalar_lea.sflag [#allocation4], 1
    %354 = vsyncpa %s353, 1
    %355 = vsyncpa [#allocation7], 1
    %s356 = scalar_lea.sflag [#allocation7], 1
    %357 = vsyncpa %s356, 1
    %358 = vsyncpa [#allocation5], 1
    %s359 = scalar_lea.sflag [#allocation5], 1
    %360 = vsyncpa %s359, 1

</llo_original>
